<compile_context>
chip_gen: v7x
topology: tpu7x:2x2x1
jax: 0.10.0
libtpu: 0.0.40
codegen_flags: <defaults>
</compile_context>

<pallas_src>
import functools

import jax
import jax.numpy as jnp
from jax import lax
from jax.experimental import pallas as pl
from jax.experimental.pallas import tpu as pltpu


_ACTIVATIONS = {
    "relu": lambda y: jnp.maximum(y, 0.0),
    "gelu": jax.nn.gelu,
    "tanh": jnp.tanh,
    "sigmoid": jax.nn.sigmoid,
}


def _epilogue(y, scale_ref, shift_ref, *, use_scale, use_shift, activation):
    # y is f32. Per-output-channel affine (folded bias / BatchNorm1d inference), then activation.
    if use_scale:
        y = y * scale_ref[...].astype(jnp.float32)
    if use_shift:
        y = y + shift_ref[...].astype(jnp.float32)
    if activation is not None:
        y = _ACTIVATIONS[activation](y)
    return y


def _mlp_kernel_multi_k(x_ref, w_ref, scale_ref, shift_ref, o_ref, acc_ref, *,
                        use_scale, use_shift, activation):
    # x_ref: (tm, tk)   w_ref: (tn, tk) [PyTorch layout, contracted on dim 1]
    # scale_ref/shift_ref: (1, tn)      o_ref: (tm, tn)   acc_ref: (tm, tn) f32 scratch
    k = pl.program_id(2)

    @pl.when(k == 0)
    def _():
        acc_ref[...] = jnp.zeros_like(acc_ref)

    acc_ref[...] += lax.dot_general(
        x_ref[...], w_ref[...],
        dimension_numbers=(((1,), (1,)), ((), ())),
        preferred_element_type=jnp.float32)

    @pl.when(k == pl.num_programs(2) - 1)
    def _():
        y = _epilogue(acc_ref[...], scale_ref, shift_ref,
                      use_scale=use_scale, use_shift=use_shift, activation=activation)
        o_ref[...] = y.astype(o_ref.dtype)


def _mlp_kernel_single_k(x_ref, w_ref, scale_ref, shift_ref, o_ref, *,
                         use_scale, use_shift, activation):
    # Whole K fits in one tile: no accumulator scratch, no k-branches.
    y = lax.dot_general(
        x_ref[...], w_ref[...],
        dimension_numbers=(((1,), (1,)), ((), ())),
        preferred_element_type=jnp.float32)
    y = _epilogue(y, scale_ref, shift_ref,
                  use_scale=use_scale, use_shift=use_shift, activation=activation)
    o_ref[...] = y.astype(o_ref.dtype)


def _round_up(x, m):
    return ((x + m - 1) // m) * m


def mlp_block(x, weight, bias=None, *, bn_stats=None, bn_eps=1e-5, activation="relu",
              tm_max=256, tn_max=512, tk_max=512):
    """Fused MLPBlock forward: Linear (+ BatchNorm1d inference) (+ activation).

    x: (B, C_in); weight: (C_out, C_in) [PyTorch layout]; bias: (C_out,) or None.
    bn_stats: optional (gamma, beta, running_mean, running_var), each (C_out,).
    activation: one of None, "relu", "gelu", "tanh", "sigmoid".
    """
    M, K = x.shape
    N, K_w = weight.shape
    assert K == K_w, "weight must be (C_out, C_in)"
    if activation is not None and activation not in _ACTIVATIONS:
        raise ValueError(f"unsupported activation: {activation}")

    # Fold bias + BatchNorm1d (inference) into a single per-channel affine y = acc*scale + shift.
    f32 = jnp.float32
    if bn_stats is not None:
        gamma, beta, mean, var = (jnp.asarray(a, f32) for a in bn_stats)
        s = gamma * lax.rsqrt(var + bn_eps)
        base = jnp.asarray(bias, f32) if bias is not None else jnp.zeros((N,), f32)
        scale = s
        shift = (base - mean) * s + beta
        use_scale, use_shift = True, True
    else:
        scale = jnp.ones((N,), f32)
        shift = jnp.asarray(bias, f32) if bias is not None else jnp.zeros((N,), f32)
        use_scale, use_shift = False, bias is not None

    # 8/128-aligned tiles, capped so the double-buffered VMEM footprint stays small.
    tm = min(tm_max, _round_up(M, 8))
    tn = min(tn_max, _round_up(N, 128))   # lane-dense output tile (multiple of 128)
    tk = min(tk_max, _round_up(K, 128))
    M_pad, N_pad, K_pad = _round_up(M, tm), _round_up(N, tn), _round_up(K, tk)

    x_p = x if (M_pad == M and K_pad == K) else jnp.pad(x, ((0, M_pad - M), (0, K_pad - K)))
    w_p = weight if (N_pad == N and K_pad == K) else jnp.pad(weight, ((0, N_pad - N), (0, K_pad - K)))
    scale_p = (scale if N_pad == N else jnp.pad(scale, (0, N_pad - N))).reshape(1, N_pad)
    shift_p = (shift if N_pad == N else jnp.pad(shift, (0, N_pad - N))).reshape(1, N_pad)

    gm, gn, gk = M_pad // tm, N_pad // tn, K_pad // tk

    itemsize = jnp.dtype(x.dtype).itemsize
    cost = pl.CostEstimate(
        flops=2 * M * N * K,
        transcendentals=0,
        bytes_accessed=(M * K + N * K + M * N) * itemsize + 2 * N * 4)

    if gk == 1:
        kernel = functools.partial(_mlp_kernel_single_k, use_scale=use_scale,
                                   use_shift=use_shift, activation=activation)
        grid_spec = pltpu.PrefetchScalarGridSpec(
            num_scalar_prefetch=0,
            grid=(gm, gn),
            in_specs=[
                pl.BlockSpec((tm, tk), lambda i, j: (i, 0)),   # activations
                pl.BlockSpec((tn, tk), lambda i, j: (j, 0)),   # weight (PyTorch layout)
                pl.BlockSpec((1, tn), lambda i, j: (0, j)),    # folded scale
                pl.BlockSpec((1, tn), lambda i, j: (0, j)),    # folded shift (bias/BN)
            ],
            out_specs=pl.BlockSpec((tm, tn), lambda i, j: (i, j)),
        )
        dim_sem = ("parallel", "parallel")
    else:
        kernel = functools.partial(_mlp_kernel_multi_k, use_scale=use_scale,
                                   use_shift=use_shift, activation=activation)
        grid_spec = pltpu.PrefetchScalarGridSpec(
            num_scalar_prefetch=0,
            grid=(gm, gn, gk),
            in_specs=[
                pl.BlockSpec((tm, tk), lambda i, j, k: (i, k)),
                pl.BlockSpec((tn, tk), lambda i, j, k: (j, k)),
                pl.BlockSpec((1, tn), lambda i, j, k: (0, j)),
                pl.BlockSpec((1, tn), lambda i, j, k: (0, j)),
            ],
            out_specs=pl.BlockSpec((tm, tn), lambda i, j, k: (i, j)),
            scratch_shapes=[pltpu.VMEM((tm, tn), jnp.float32)],
        )
        dim_sem = ("parallel", "parallel", "arbitrary")

    out_pad = pl.pallas_call(
        kernel,
        out_shape=jax.ShapeDtypeStruct((M_pad, N_pad), x.dtype),
        grid_spec=grid_spec,
        compiler_params=pltpu.CompilerParams(
            dimension_semantics=dim_sem,
            vmem_limit_bytes=48 * 1024 * 1024,
        ),
        cost_estimate=cost,
    )(x_p, w_p, scale_p, shift_p)

    if (M_pad, N_pad) != (M, N):
        out_pad = out_pad[:M, :N]
    return out_pad


if __name__ == "__main__":
    key = jax.random.PRNGKey(0)
    kx, kw, kb, kg, kbt, km, kv = jax.random.split(key, 7)

    # 1) Default MLPBlock config: Linear + bias + ReLU (single-K-tile fast path).
    B, C_in, C_out = 8, 32, 64
    x = jax.random.normal(kx, (B, C_in), dtype=jnp.float32)
    bound = 1.0 / (C_in ** 0.5)   # mimics nn.Linear's uniform(-1/sqrt(C_in), 1/sqrt(C_in))
    weight = jax.random.uniform(kw, (C_out, C_in), minval=-bound, maxval=bound, dtype=jnp.float32)
    bias = jax.random.uniform(kb, (C_out,), minval=-bound, maxval=bound, dtype=jnp.float32)

    out = jax.block_until_ready(mlp_block(x, weight, bias, activation="relu"))
    ref = jnp.maximum(x @ weight.T + bias, 0.0)
    assert out.shape == (B, C_out)
    assert jnp.allclose(out, ref, atol=1e-5, rtol=1e-5)

    # 2) Linear + BatchNorm1d (inference, folded) + ReLU.
    gamma = 1.0 + 0.1 * jax.random.normal(kg, (C_out,), dtype=jnp.float32)
    beta = 0.1 * jax.random.normal(kbt, (C_out,), dtype=jnp.float32)
    mean = 0.05 * jax.random.normal(km, (C_out,), dtype=jnp.float32)
    var = jnp.abs(jax.random.normal(kv, (C_out,), dtype=jnp.float32)) + 0.5
    out_bn = jax.block_until_ready(
        mlp_block(x, weight, bias, bn_stats=(gamma, beta, mean, var), activation="relu"))
    lin = x @ weight.T + bias
    ref_bn = jnp.maximum((lin - mean) * (gamma / jnp.sqrt(var + 1e-5)) + beta, 0.0)
    assert jnp.allclose(out_bn, ref_bn, atol=1e-4, rtol=1e-4)

    # 3) Non-aligned, multi-K-tile shape (padding + K-loop accumulator epilogue),
    #    no bias, no activation.
    B2, Ci2, Co2 = 100, 300, 200
    x2 = jax.random.normal(kx, (B2, Ci2), dtype=jnp.float32)
    w2 = jax.random.normal(kw, (Co2, Ci2), dtype=jnp.float32) * 0.05
    out2 = jax.block_until_ready(mlp_block(x2, w2, None, activation=None, tk_max=128))
    ref2 = x2 @ w2.T
    assert out2.shape == (B2, Co2)
    assert jnp.allclose(out2, ref2, atol=1e-4, rtol=1e-4)

    print("KERNEL_OK")
</pallas_src>

<mosaic_0001>
module attributes {stable_mosaic.version = 11 : i64} {
  func.func @_mlp_kernel_single_k(%arg0: i32, %arg1: i32, %arg2: memref<8x128xf32, #tpu.memory_space<vmem>>, %arg3: memref<128x128xf32, #tpu.memory_space<vmem>>, %arg4: memref<1x128xf32, #tpu.memory_space<vmem>>, %arg5: memref<1x128xf32, #tpu.memory_space<vmem>>, %arg6: memref<8x128xf32, #tpu.memory_space<vmem>>) attributes {dimension_semantics = [#tpu.dimension_semantics<parallel>, #tpu.dimension_semantics<parallel>], iteration_bounds = array<i64: 1, 1>, scalar_prefetch = 0 : i64, scratch_operands = 0 : i64, tpu.core_type = #tpu.core_type<tc>, window_params = [{transform_indices = @transform_0, window_bounds = array<i64: 8, 128>}, {transform_indices = @transform_1, window_bounds = array<i64: 128, 128>}, {transform_indices = @transform_2, window_bounds = array<i64: 1, 128>}, {transform_indices = @transform_3, window_bounds = array<i64: 1, 128>}, {transform_indices = @transform_4, window_bounds = array<i64: 8, 128>}]} {
    %c0 = arith.constant 0 : index
    %c0_0 = arith.constant 0 : index
    %0 = vector.load %arg2[%c0, %c0_0] : memref<8x128xf32, #tpu.memory_space<vmem>>, vector<8x128xf32>
    %c0_1 = arith.constant 0 : index
    %c0_2 = arith.constant 0 : index
    %1 = vector.load %arg3[%c0_1, %c0_2] : memref<128x128xf32, #tpu.memory_space<vmem>>, vector<128x128xf32>
    %cst = arith.constant dense<0.000000e+00> : vector<8x128xf32>
    %2 = tpu.matmul %0, %1, %cst {dimension_numbers = #tpu.dot_dimension_numbers<[1], [1], [0], [0], [0, 0, 1, 0], [], []>} : vector<8x128xf32>, vector<128x128xf32>, vector<8x128xf32> -> vector<8x128xf32>
    %c0_3 = arith.constant 0 : index
    %c0_4 = arith.constant 0 : index
    %3 = vector.load %arg5[%c0_3, %c0_4] : memref<1x128xf32, #tpu.memory_space<vmem>>, vector<1x128xf32>
    %4 = vector.broadcast %3 : vector<1x128xf32> to vector<8x128xf32>
    %5 = arith.addf %2, %4 : vector<8x128xf32>
    %cst_5 = arith.constant 0.000000e+00 : f32
    %6 = vector.broadcast %cst_5 : f32 to vector<8x128xf32>
    %7 = arith.maximumf %5, %6 : vector<8x128xf32>
    %c0_6 = arith.constant 0 : index
    %c0_7 = arith.constant 0 : index
    %8 = vector.load %arg6[%c0_6, %c0_7] : memref<8x128xf32, #tpu.memory_space<vmem>>, vector<8x128xf32>
    tpu.vector_store %arg6[%c0_6, %c0_7], %7 {strides = array<i32>} : memref<8x128xf32, #tpu.memory_space<vmem>>, vector<8x128xf32>,
    return
  }
  func.func @transform_0(%arg0: i32, %arg1: i32) -> (i32, i32) {
    %c0_i32 = arith.constant 0 : i32
    %c0_i32_0 = arith.constant 0 : i32
    return %arg0, %c0_i32 : i32, i32
  }
  func.func @transform_1(%arg0: i32, %arg1: i32) -> (i32, i32) {
    %c0_i32 = arith.constant 0 : i32
    %c0_i32_0 = arith.constant 0 : i32
    return %arg1, %c0_i32 : i32, i32
  }
  func.func @transform_2(%arg0: i32, %arg1: i32) -> (i32, i32) {
    %c0_i32 = arith.constant 0 : i32
    %c0_i32_0 = arith.constant 0 : i32
    return %c0_i32, %arg1 : i32, i32
  }
  func.func @transform_3(%arg0: i32, %arg1: i32) -> (i32, i32) {
    %c0_i32 = arith.constant 0 : i32
    %c0_i32_0 = arith.constant 0 : i32
    return %c0_i32, %arg1 : i32, i32
  }
  func.func @transform_4(%arg0: i32, %arg1: i32) -> (i32, i32) {
    %c0_i32 = arith.constant 0 : i32
    return %arg0, %arg1 : i32, i32
  }
}

</mosaic_0001>

<llo_original>
// kernel: tpu_custom_call.1
$region0: #{tpu_custom_call.1}
  #allocation0 [shape = 'u32[]', space=smem, size = 0x4, offset = 0x4, fixed_abs, tag = 'smem constant byte address 0x4 - core index']
  #allocation1 [shape = 'u32[144,128]{1,0:T(1,128)}', space=vmem, size = 0x12000, scoped, tag = 'internal scratch']
  %s0 = inlined_call_operand.hbm [shape: f32[8,128], index: 0, kind: input, shape index: {}]
  %s1 = inlined_call_operand.hbm [shape: f32[128,128], index: 1, kind: input, shape index: {}]
  %s2 = inlined_call_operand.vmem [shape: f32[1,128], index: 2, kind: input, shape index: {}]
  %s3 = inlined_call_operand.vmem [shape: f32[1,128], index: 3, kind: input, shape index: {}]
  %s4 = inlined_call_operand.hbm [shape: f32[8,128], index: 4, kind: output, shape index: {}]
  %s5 = sld [smem:[#allocation0]]
  $region34: #{tpu_custom_call.1} parent=0
    _
  %s7 = ssub.s32 1, %s5
  %s8 = scalar_select 0, %s7, %s5
  $region1: #{tpu_custom_call.1} parent=0
    #allocation2 [shape = 'u8[4096]{0}', space=vmem, size = 0x1000, scoped, tag = 'input window, operand 0, single buffered']
    #allocation3 [shape = 's32[1]{0}', space=sflag, size = 0x4, scoped, tag = 'scoped memory for tpu_custom_call.1']
    #allocation4 [shape = 's32[1]{0}', space=sflag, size = 0x4, scoped, tag = 'scoped memory for tpu_custom_call.1']
    #allocation5 [shape = 'u8[65536]{0}', space=vmem, size = 0x10000, scoped, tag = 'input window, operand 1, single buffered']
    #allocation6 [shape = 's32[1]{0}', space=sflag, size = 0x4, scoped, tag = 'scoped memory for tpu_custom_call.1']
    #allocation7 [shape = 'u8[4096]{0}', space=vmem, size = 0x1000, scoped, tag = 'output window, operand 0, single buffered']
    %9 = vsyncpa [#allocation3], 0
    %10 = vsyncpa [#allocation6], 0
    %11 = vsyncpa [#allocation4], 0
    // Predicated region
    $region2: #{tpu_custom_call.1} parent=1 // pred_check
      _
    $region3: #{tpu_custom_call.1} parent=1 // pred_check_branch
      %13 = sbr.rel (0) target = $region5
    $region4: #{tpu_custom_call.1} parent=1 // pred_region
      %s15 = ssub.s32 128, 128
      %16 = vsyncadd [#allocation3], %s15
      %s18 = sshll.u32 [#allocation2], 4
      %s19 = int_to_ptr.vmem [resolvable:$true] %s18
      %21 = dma.hbm_to_vmem [thread:$0]  %s0, 128, %s19, [#allocation3]
    $region5: #{tpu_custom_call.1} parent=1 // pred_fallthru
      _
    // Predicated region
    $region6: #{tpu_custom_call.1} parent=1 // pred_check
      _
    $region7: #{tpu_custom_call.1} parent=1 // pred_check_branch
      %23 = sbr.rel (0) target = $region9
    $region8: #{tpu_custom_call.1} parent=1 // pred_region
      %s25 = ssub.s32 2048, 2048
      %26 = vsyncadd [#allocation6], %s25
      %s27 = sshll.u32 [#allocation5], 4
      %s28 = int_to_ptr.vmem [resolvable:$true] %s27
      %33 = dma.hbm_to_vmem [thread:$0]  %s1, 2048, %s28, [#allocation6], 128, 128, 8
    $region9: #{tpu_custom_call.1} parent=1 // pred_fallthru
      _
    // Predicated region
    $region10: #{tpu_custom_call.1} parent=1 // pred_check
      _
    $region11: #{tpu_custom_call.1} parent=1 // pred_check_branch
      %35 = sbr.rel (0) target = $region13
    $region12: #{tpu_custom_call.1} parent=1 // pred_region
      _
    $region13: #{tpu_custom_call.1} parent=1 // pred_fallthru
      _
    // Predicated region
    $region14: #{tpu_custom_call.1} parent=1 // pred_check
      _
    $region15: #{tpu_custom_call.1} parent=1 // pred_check_branch
      %37 = sbr.rel (0) target = $region17
    $region16: #{tpu_custom_call.1} parent=1 // pred_region
      _
    $region17: #{tpu_custom_call.1} parent=1 // pred_fallthru
      _
    // Predicated region
    $region18: #{tpu_custom_call.1} parent=1 // pred_check
      _
    $region19: #{tpu_custom_call.1} parent=1 // pred_check_branch
      %39 = sbr.rel (0) target = $region21
    $region20: #{tpu_custom_call.1} parent=1 // pred_region
      %40 = dma.done [#allocation3], 128
    $region21: #{tpu_custom_call.1} parent=1 // pred_fallthru
      _
    // Predicated region
    $region22: #{tpu_custom_call.1} parent=1 // pred_check
      _
    $region23: #{tpu_custom_call.1} parent=1 // pred_check_branch
      %42 = sbr.rel (0) target = $region25
    $region24: #{tpu_custom_call.1} parent=1 // pred_region
      %43 = dma.done [#allocation6], 2048
    $region25: #{tpu_custom_call.1} parent=1 // pred_fallthru
      _
    %v44 = vld [vmem:[#allocation2] sm:$0xff]
    %v45 = vld [vmem:[#allocation5] sm:$0xff]
    %v46 = vld [vmem:[#allocation5 + $0x8] sm:$0xff]
    %v47 = vld [vmem:[#allocation5 + $0x10] sm:$0xff]
    %v48 = vld [vmem:[#allocation5 + $0x18] sm:$0xff]
    %v49 = vld [vmem:[#allocation5 + $0x20] sm:$0xff]
    %v50 = vld [vmem:[#allocation5 + $0x28] sm:$0xff]
    %v51 = vld [vmem:[#allocation5 + $0x30] sm:$0xff]
    %v52 = vld [vmem:[#allocation5 + $0x38] sm:$0xff]
    %v53 = vld [vmem:[#allocation5 + $0x40] sm:$0xff]
    %v54 = vld [vmem:[#allocation5 + $0x48] sm:$0xff]
    %v55 = vld [vmem:[#allocation5 + $0x50] sm:$0xff]
    %v56 = vld [vmem:[#allocation5 + $0x58] sm:$0xff]
    %v57 = vld [vmem:[#allocation5 + $0x60] sm:$0xff]
    %v58 = vld [vmem:[#allocation5 + $0x68] sm:$0xff]
    %v59 = vld [vmem:[#allocation5 + $0x70] sm:$0xff]
    %v60 = vld [vmem:[#allocation5 + $0x78] sm:$0xff]
    %v61 = vld [vmem:[%s3] sm:$0x1]
    %v63 = vlaneseq
    %v64 = vshrl.u32 %v63, 7
    %v65 = vsub.s32 0, %v64
    %v66 = vrot.slane %v61, %v65
    %68 = vmatprep.subr.mxu0 0.0
    %69 = vmatpush1.xpose.msra.mxu0 %v45
    %70 = vmatprep.subr.mxu0 0.0
    %71 = vmatpush1.xpose.msra.mxu0 %v46
    %72 = vmatprep.subr.mxu0 0.0
    %73 = vmatpush1.xpose.msra.mxu0 %v47
    %74 = vmatprep.subr.mxu0 0.0
    %75 = vmatpush1.xpose.msra.mxu0 %v48
    %76 = vmatprep.subr.mxu0 0.0
    %77 = vmatpush1.xpose.msra.mxu0 %v49
    %78 = vmatprep.subr.mxu0 0.0
    %79 = vmatpush1.xpose.msra.mxu0 %v50
    %80 = vmatprep.subr.mxu0 0.0
    %81 = vmatpush1.xpose.msra.mxu0 %v51
    %82 = vmatprep.subr.mxu0 0.0
    %83 = vmatpush1.xpose.msra.mxu0 %v52
    %84 = vmatprep.subr.mxu0 0.0
    %85 = vmatpush1.xpose.msra.mxu0 %v53
    %86 = vmatprep.subr.mxu0 0.0
    %87 = vmatpush1.xpose.msra.mxu0 %v54
    %88 = vmatprep.subr.mxu0 0.0
    %89 = vmatpush1.xpose.msra.mxu0 %v55
    %90 = vmatprep.subr.mxu0 0.0
    %91 = vmatpush1.xpose.msra.mxu0 %v56
    %92 = vmatprep.subr.mxu0 0.0
    %93 = vmatpush1.xpose.msra.mxu0 %v57
    %94 = vmatprep.subr.mxu0 0.0
    %95 = vmatpush1.xpose.msra.mxu0 %v58
    %96 = vmatprep.subr.mxu0 0.0
    %97 = vmatpush1.xpose.msra.mxu0 %v59
    %98 = vmatprep.subr.mxu0 0.0
    %99 = vmatpush1.xpose.msra.mxu0 %v60
    %100 = vmatprep.subr.mxu0 0.0
    %101 = vmatpush1.xpose.msra.mxu0 0.0
    %102 = vmatprep.subr.mxu0 0.0
    %103 = vmatpush1.xpose.msra.mxu0 0.0
    %104 = vmatprep.subr.mxu0 0.0
    %105 = vmatpush1.xpose.msra.mxu0 0.0
    %106 = vmatprep.subr.mxu0 0.0
    %107 = vmatpush1.xpose.msra.mxu0 0.0
    %108 = vmatprep.subr.mxu0 0.0
    %109 = vmatpush1.xpose.msra.mxu0 0.0
    %110 = vmatprep.subr.mxu0 0.0
    %111 = vmatpush1.xpose.msra.mxu0 0.0
    %112 = vmatprep.subr.mxu0 0.0
    %113 = vmatpush1.xpose.msra.mxu0 0.0
    %114 = vmatprep.subr.mxu0 0.0
    %115 = vmatpush1.xpose.msra.mxu0 0.0
    %116 = vmatprep.subr.mxu0 0.0
    %117 = vmatpush1.xpose.msra.mxu0 0.0
    %118 = vmatprep.subr.mxu0 0.0
    %119 = vmatpush1.xpose.msra.mxu0 0.0
    %120 = vmatprep.subr.mxu0 0.0
    %121 = vmatpush1.xpose.msra.mxu0 0.0
    %122 = vmatprep.subr.mxu0 0.0
    %123 = vmatpush1.xpose.msra.mxu0 0.0
    %124 = vmatprep.subr.mxu0 0.0
    %125 = vmatpush1.xpose.msra.mxu0 0.0
    %126 = vmatprep.subr.mxu0 0.0
    %127 = vmatpush1.xpose.msra.mxu0 0.0
    %128 = vmatprep.subr.mxu0 0.0
    %129 = vmatpush1.xpose.msra.mxu0 0.0
    %130 = vmatprep.subr.mxu0 0.0
    %131 = vmatpush1.xpose.msra.mxu0 0.0
    %132 = vmatprep.mubr.f32.mxu0 0.0
    %133 = vmatmul.mubr.f32.gmra.mrb[0].mxu0 %v44
    %v134 = vpop.f32.mrb[0].mxu0
    %v135 = vadd.f32 %v66, %v134
    %v136 = vpop.f32.mrb[0].mxu0
    %137 = vdwg.mxu0
    %v138 = vmax.f32 %v135, 0.0
    %139 = vst [vmem:[#allocation7] sm:$0xff] %v138
    // Predicated region
    $region26: #{tpu_custom_call.1} parent=1 // pred_check
      _
    $region27: #{tpu_custom_call.1} parent=1 // pred_check_branch
      %141 = sbr.rel (0) target = $region29
    $region28: #{tpu_custom_call.1} parent=1 // pred_region
      %s143 = ssub.s32 128, 128
      %144 = vsyncadd [#allocation4], %s143
      %s146 = sshll.u32 [#allocation7], 4
      %s147 = int_to_ptr.vmem [resolvable:$true] %s146
      %149 = dma.vmem_to_hbm [thread:$0]  %s147, 128, %s4, [#allocation4]
    $region29: #{tpu_custom_call.1} parent=1 // pred_fallthru
      _
    // Predicated region
    $region30: #{tpu_custom_call.1} parent=1 // pred_check
      _
    $region31: #{tpu_custom_call.1} parent=1 // pred_check_branch
      %151 = sbr.rel (0) target = $region33
    $region32: #{tpu_custom_call.1} parent=1 // pred_region
      %152 = dma.done [#allocation4], 128
    $region33: #{tpu_custom_call.1} parent=1 // pred_fallthru
      _
    %153 = vsyncpa [#allocation3], 1
    %154 = vsyncpa [#allocation6], 1
    %155 = vsyncpa [#allocation4], 1

</llo_original>
